<compile_context>
chip_gen: v6e
topology: v6e:2x2x1
jax: 0.10.0
libtpu: 0.0.40
codegen_flags: <defaults>
</compile_context>

<pallas_src>
import jax
import jax.numpy as jnp
from jax.experimental import pallas as pl
from jax.experimental.pallas import tpu as pltpu


def _round_up(n, m):
    return ((n + m - 1) // m) * m


def _mlp_kernel(x_ref, w1_ref, c1_ref, w2_ref, c2_ref, w3_ref, b3_ref, o_ref):
    # x streamed f32 from HBM; cast to bf16 in-register for the MXU fast path.
    x = x_ref[...].astype(w1_ref.dtype)

    # fc1 (bn1 scale already folded into w1) + shift + ReLU. f32 accumulation.
    h1 = jnp.dot(x, w1_ref[...], preferred_element_type=jnp.float32)
    h1 = jnp.maximum(h1 + c1_ref[...], 0.0)

    # Dropout(0.2) -> identity in eval mode.

    # fc2 (bn2 scale folded into w2) + shift + ReLU.
    h2 = jnp.dot(h1.astype(w2_ref.dtype), w2_ref[...],
                 preferred_element_type=jnp.float32)
    h2 = jnp.maximum(h2 + c2_ref[...], 0.0)

    # fc3: out_features == 1, so skip the MXU (N=1 matmul wastes columns) and do a
    # VPU broadcast-multiply + XLU lane reduction.  b3 is an SMEM scalar.
    logit = jnp.sum(h2 * w3_ref[...], axis=-1, keepdims=True) + b3_ref[0]

    # Numerically stable sigmoid: exp + reciprocal on the EUP, select on the VPU.
    # sigmoid(x) = where(x>=0, 1 - s, s),  s = sigmoid(-|x|).
    z = jnp.exp(-jnp.abs(logit))
    s = z * pl.reciprocal(1.0 + z, approx=True)
    o_ref[...] = jnp.where(logit >= 0.0, 1.0 - s, s)


def binary_classifier_forward(x, params, *, eps=1e-5, block_rows=2048,
                              compute_dtype=jnp.bfloat16):
    """x: (B, 2*input_dim) float32. Returns (B,) float32 probabilities."""
    B, d_in = x.shape

    w1, b1, g1, beta1, mu1, var1 = (params[k] for k in
                                    ("w1", "b1", "g1", "beta1", "mu1", "var1"))
    w2, b2, g2, beta2, mu2, var2 = (params[k] for k in
                                    ("w2", "b2", "g2", "beta2", "mu2", "var2"))
    w3, b3 = params["w3"], params["b3"]

    # Fold eval-mode BatchNorm into the weights (scale) and a per-feature shift.
    # These are tiny one-time ops (weights only); x itself is NOT touched here.
    s1 = g1 / jnp.sqrt(var1 + eps)
    w1f = (w1 * s1[None, :]).astype(compute_dtype)
    c1 = ((b1 - mu1) * s1 + beta1).reshape(1, -1).astype(jnp.float32)

    s2 = g2 / jnp.sqrt(var2 + eps)
    w2f = (w2 * s2[None, :]).astype(compute_dtype)
    c2 = ((b2 - mu2) * s2 + beta2).reshape(1, -1).astype(jnp.float32)

    w3r = w3.reshape(1, -1).astype(jnp.float32)   # (1, 64)  VMEM row
    b3r = b3.reshape(1).astype(jnp.float32)       # (1,)     SMEM scalar

    h1_dim = w1f.shape[1]   # 128
    h2_dim = w2f.shape[1]   # 64

    # Batch tile (items 1/2/7):
    #   * multiple of 16 (bf16 sublane packing of intermediates),
    #   * grows with B up to block_rows,
    #   * capped at ~ceil(B/2) so a v7x megacore always gets >=2 parallel steps.
    half = (B + 1) // 2
    TB = max(16, min(_round_up(block_rows, 16), _round_up(half, 16)))

    # No full-array pad (item 4): rely on the partial final block.  Only when the
    # whole batch is smaller than one 16-row tile do we pad (<=15 rows, negligible).
    xk = x
    if B < TB:
        xk = jnp.pad(x, ((0, TB - B), (0, 0)))
    B_k = xk.shape[0]
    grid = (pl.cdiv(B_k, TB),)

    out = pl.pallas_call(
        _mlp_kernel,
        grid=grid,
        in_specs=[
            # x: f32, tiled along batch; double-buffered DMA pipeline.
            pl.BlockSpec((TB, d_in), lambda i: (i, 0)),
            # weights / shifts: constant block index -> stay resident in VMEM.
            pl.BlockSpec((d_in, h1_dim), lambda i: (0, 0)),
            pl.BlockSpec((1, h1_dim), lambda i: (0, 0)),
            pl.BlockSpec((h1_dim, h2_dim), lambda i: (0, 0)),
            pl.BlockSpec((1, h2_dim), lambda i: (0, 0)),
            pl.BlockSpec((1, h2_dim), lambda i: (0, 0)),
            # b3: scalar in SMEM (no padded (8,128) VMEM tile, no operand stream).
            pl.BlockSpec(memory_space=pltpu.MemorySpace.SMEM),
        ],
        out_specs=pl.BlockSpec((TB, 1), lambda i: (i, 0)),
        out_shape=jax.ShapeDtypeStruct((B_k, 1), jnp.float32),
        compiler_params=pltpu.CompilerParams(
            dimension_semantics=("parallel",),      # shard batch tiles across TCs
            vmem_limit_bytes=32 * 1024 * 1024,
        ),
    )(xk, w1f, c1, w2f, c2, w3r, b3r)

    return out[:B, 0]   # squeeze(1) + drop any tail rows from the partial block


def binary_classifier_reference(x, params, eps=1e-5):
    """Pure-JAX f32 reference (eval-mode BatchNorm), for correctness checking."""
    h = x @ params["w1"] + params["b1"]
    h = (h - params["mu1"]) / jnp.sqrt(params["var1"] + eps) * params["g1"] + params["beta1"]
    h = jnp.maximum(h, 0.0)
    h = h @ params["w2"] + params["b2"]
    h = (h - params["mu2"]) / jnp.sqrt(params["var2"] + eps) * params["g2"] + params["beta2"]
    h = jnp.maximum(h, 0.0)
    logits = h @ params["w3"] + params["b3"]
    return jax.nn.sigmoid(logits)[:, 0]


def init_params(key, input_dim):
    """Deterministic parameter init matching the PyTorch module's shapes."""
    d_in = input_dim * 2
    ks = jax.random.split(key, 12)

    def lin(kw, kb, fan_in, fan_out):
        bound = 1.0 / jnp.sqrt(fan_in)
        w = jax.random.uniform(kw, (fan_in, fan_out), jnp.float32, -bound, bound)
        b = jax.random.uniform(kb, (fan_out,), jnp.float32, -bound, bound)
        return w, b

    w1, b1 = lin(ks[0], ks[1], d_in, 128)
    w2, b2 = lin(ks[2], ks[3], 128, 64)
    w3, b3 = lin(ks[4], ks[5], 64, 1)

    # BatchNorm1d params / running stats (perturbed so the fold is non-trivial).
    g1 = 1.0 + 0.1 * jax.random.normal(ks[6], (128,), jnp.float32)
    beta1 = 0.05 * jax.random.normal(ks[7], (128,), jnp.float32)
    mu1 = 0.1 * jax.random.normal(ks[8], (128,), jnp.float32)
    var1 = 1.0 + 0.1 * jnp.abs(jax.random.normal(ks[9], (128,), jnp.float32))

    g2 = 1.0 + 0.1 * jax.random.normal(ks[10], (64,), jnp.float32)
    beta2 = 0.05 * jax.random.normal(ks[11], (64,), jnp.float32)
    mu2 = jnp.zeros((64,), jnp.float32)
    var2 = jnp.ones((64,), jnp.float32)

    return dict(w1=w1, b1=b1, g1=g1, beta1=beta1, mu1=mu1, var1=var1,
                w2=w2, b2=b2, g2=g2, beta2=beta2, mu2=mu2, var2=var2,
                w3=w3, b3=b3)


if __name__ == "__main__":
    key = jax.random.PRNGKey(0)
    k_param, k_x, k_x2 = jax.random.split(key, 3)

    input_dim = 16          # feature_pairs has 2 * input_dim = 32 features
    batch = 8

    params = init_params(k_param, input_dim)

    # Case 1: micro-batch (B < 16) -> single (tiny-padded) tile.
    x = jax.random.normal(k_x, (batch, 2 * input_dim), dtype=jnp.float32)
    y = jax.block_until_ready(binary_classifier_forward(x, params))
    y_ref = binary_classifier_reference(x, params)
    assert y.shape == (batch,)
    assert bool(jnp.all(jnp.isfinite(y)))
    assert bool(jnp.all((y >= 0.0) & (y <= 1.0)))
    assert bool(jnp.max(jnp.abs(y - y_ref)) < 2e-2), "mismatch vs reference"

    # Case 2: ragged multi-step grid with a partial final block (no pad copy):
    # B=200, TB=64 -> grid=(4,), last block has 8 valid rows.
    x2 = jax.random.normal(k_x2, (200, 2 * input_dim), dtype=jnp.float32)
    y2 = jax.block_until_ready(
        binary_classifier_forward(x2, params, block_rows=64))
    y2_ref = binary_classifier_reference(x2, params)
    assert y2.shape == (200,)
    assert bool(jnp.all(jnp.isfinite(y2)))
    assert bool(jnp.all((y2 >= 0.0) & (y2 <= 1.0)))
    assert bool(jnp.max(jnp.abs(y2 - y2_ref)) < 2e-2), "mismatch vs reference"

    # Case 3: default tile policy (TB = round_up(ceil(B/2),16)=112 -> 2 parallel
    # steps, exercising the v7x two-step megacore path and the ragged tail).
    y3 = jax.block_until_ready(binary_classifier_forward(x2, params))
    assert y3.shape == (200,)
    assert bool(jnp.all(jnp.isfinite(y3)))
    assert bool(jnp.max(jnp.abs(y3 - y2_ref)) < 2e-2), "mismatch vs reference"

    print("KERNEL_OK")
</pallas_src>

<mosaic_0001>
module attributes {stable_mosaic.version = 11 : i64} {
  func.func @_mlp_kernel(%arg0: i32, %arg1: memref<16x32xf32, #tpu.memory_space<vmem>>, %arg2: memref<32x128xbf16, #tpu.memory_space<vmem>>, %arg3: memref<1x128xf32, #tpu.memory_space<vmem>>, %arg4: memref<128x64xbf16, #tpu.memory_space<vmem>>, %arg5: memref<1x64xf32, #tpu.memory_space<vmem>>, %arg6: memref<1x64xf32, #tpu.memory_space<vmem>>, %arg7: memref<1xf32, #tpu.memory_space<smem>>, %arg8: memref<16x1xf32, #tpu.memory_space<vmem>>) attributes {dimension_semantics = [#tpu.dimension_semantics<parallel>], iteration_bounds = array<i64: 1>, scalar_prefetch = 0 : i64, scratch_operands = 0 : i64, tpu.core_type = #tpu.core_type<tc>, window_params = [{transform_indices = @transform_0, window_bounds = array<i64: 16, 32>}, {pipeline_mode = #tpu.pipeline_mode<synchronous>, transform_indices = @transform_1, window_bounds = array<i64: 32, 128>}, {pipeline_mode = #tpu.pipeline_mode<synchronous>, transform_indices = @transform_2, window_bounds = array<i64: 1, 128>}, {pipeline_mode = #tpu.pipeline_mode<synchronous>, transform_indices = @transform_3, window_bounds = array<i64: 128, 64>}, {pipeline_mode = #tpu.pipeline_mode<synchronous>, transform_indices = @transform_4, window_bounds = array<i64: 1, 64>}, {pipeline_mode = #tpu.pipeline_mode<synchronous>, transform_indices = @transform_5, window_bounds = array<i64: 1, 64>}, {transform_indices = @transform_6, window_bounds = array<i64: 1>}, {transform_indices = @transform_7, window_bounds = array<i64: 16, 1>}]} {
    %c0 = arith.constant 0 : index
    %c0_0 = arith.constant 0 : index
    %0 = vector.load %arg1[%c0, %c0_0] : memref<16x32xf32, #tpu.memory_space<vmem>>, vector<16x32xf32>
    %1 = arith.truncf %0 : vector<16x32xf32> to vector<16x32xbf16>
    %c0_1 = arith.constant 0 : index
    %c0_2 = arith.constant 0 : index
    %2 = vector.load %arg2[%c0_1, %c0_2] : memref<32x128xbf16, #tpu.memory_space<vmem>>, vector<32x128xbf16>
    %cst = arith.constant dense<0.000000e+00> : vector<16x128xf32>
    %3 = tpu.matmul %1, %2, %cst {dimension_numbers = #tpu.dot_dimension_numbers<[1], [0], [0], [1], [0, 0, 1, 1], [], []>} : vector<16x32xbf16>, vector<32x128xbf16>, vector<16x128xf32> -> vector<16x128xf32>
    %c0_3 = arith.constant 0 : index
    %c0_4 = arith.constant 0 : index
    %4 = vector.load %arg3[%c0_3, %c0_4] : memref<1x128xf32, #tpu.memory_space<vmem>>, vector<1x128xf32>
    %5 = vector.broadcast %4 : vector<1x128xf32> to vector<16x128xf32>
    %6 = arith.addf %3, %5 : vector<16x128xf32>
    %cst_5 = arith.constant 0.000000e+00 : f32
    %7 = vector.broadcast %cst_5 : f32 to vector<16x128xf32>
    %8 = arith.maximumf %6, %7 : vector<16x128xf32>
    %9 = arith.truncf %8 : vector<16x128xf32> to vector<16x128xbf16>
    %c0_6 = arith.constant 0 : index
    %c0_7 = arith.constant 0 : index
    %10 = vector.load %arg4[%c0_6, %c0_7] : memref<128x64xbf16, #tpu.memory_space<vmem>>, vector<128x64xbf16>
    %cst_8 = arith.constant dense<0.000000e+00> : vector<16x64xf32>
    %11 = tpu.matmul %9, %10, %cst_8 {dimension_numbers = #tpu.dot_dimension_numbers<[1], [0], [0], [1], [0, 0, 1, 1], [], []>} : vector<16x128xbf16>, vector<128x64xbf16>, vector<16x64xf32> -> vector<16x64xf32>
    %c0_9 = arith.constant 0 : index
    %c0_10 = arith.constant 0 : index
    %12 = vector.load %arg5[%c0_9, %c0_10] : memref<1x64xf32, #tpu.memory_space<vmem>>, vector<1x64xf32>
    %13 = vector.broadcast %12 : vector<1x64xf32> to vector<16x64xf32>
    %14 = arith.addf %11, %13 : vector<16x64xf32>
    %cst_11 = arith.constant 0.000000e+00 : f32
    %15 = vector.broadcast %cst_11 : f32 to vector<16x64xf32>
    %16 = arith.maximumf %14, %15 : vector<16x64xf32>
    %c0_12 = arith.constant 0 : index
    %c0_13 = arith.constant 0 : index
    %17 = vector.load %arg6[%c0_12, %c0_13] : memref<1x64xf32, #tpu.memory_space<vmem>>, vector<1x64xf32>
    %18 = vector.broadcast %17 : vector<1x64xf32> to vector<16x64xf32>
    %19 = arith.mulf %16, %18 : vector<16x64xf32>
    %cst_14 = arith.constant dense<0.000000e+00> : vector<16xf32>
    %20 = vector.multi_reduction <add>, %19, %cst_14 [1] : vector<16x64xf32> to vector<16xf32>
    %21 = vector.shape_cast %20 : vector<16xf32> to vector<16x1xf32>
    %c0_15 = arith.constant 0 : index
    %22 = memref.load %arg7[%c0_15] : memref<1xf32, #tpu.memory_space<smem>>
    %23 = vector.broadcast %22 : f32 to vector<16x1xf32>
    %24 = arith.addf %21, %23 : vector<16x1xf32>
    %25 = math.absf %24 : vector<16x1xf32>
    %cst_16 = arith.constant 0.000000e+00 : f32
    %26 = vector.broadcast %cst_16 : f32 to vector<16x1xf32>
    %27 = arith.subf %26, %25 : vector<16x1xf32>
    %28 = math.exp %27 : vector<16x1xf32>
    %cst_17 = arith.constant 1.000000e+00 : f32
    %29 = vector.broadcast %cst_17 : f32 to vector<16x1xf32>
    %30 = arith.addf %29, %28 : vector<16x1xf32>
    %31 = tpu.reciprocal %30 {approx = true} : vector<16x1xf32> -> vector<16x1xf32>
    %32 = arith.mulf %28, %31 : vector<16x1xf32>
    %cst_18 = arith.constant 0.000000e+00 : f32
    %33 = vector.broadcast %cst_18 : f32 to vector<16x1xf32>
    %34 = arith.cmpf oge, %24, %33 : vector<16x1xf32>
    %cst_19 = arith.constant 1.000000e+00 : f32
    %35 = vector.broadcast %cst_19 : f32 to vector<16x1xf32>
    %36 = arith.subf %35, %32 : vector<16x1xf32>
    %37 = arith.select %34, %36, %32 : vector<16x1xi1>, vector<16x1xf32>
    %c0_20 = arith.constant 0 : index
    %c0_21 = arith.constant 0 : index
    %38 = vector.load %arg8[%c0_20, %c0_21] : memref<16x1xf32, #tpu.memory_space<vmem>>, vector<16x1xf32>
    tpu.vector_store %arg8[%c0_20, %c0_21], %37 {strides = array<i32>} : memref<16x1xf32, #tpu.memory_space<vmem>>, vector<16x1xf32>,
    return
  }
  func.func @transform_0(%arg0: i32) -> (i32, i32) {
    %c0_i32 = arith.constant 0 : i32
    %c0_i32_0 = arith.constant 0 : i32
    return %arg0, %c0_i32 : i32, i32
  }
  func.func @transform_1(%arg0: i32) -> (i32, i32) {
    %c0_i32 = arith.constant 0 : i32
    %c0_i32_0 = arith.constant 0 : i32
    %c0_i32_1 = arith.constant 0 : i32
    return %c0_i32, %c0_i32_0 : i32, i32
  }
  func.func @transform_2(%arg0: i32) -> (i32, i32) {
    %c0_i32 = arith.constant 0 : i32
    %c0_i32_0 = arith.constant 0 : i32
    %c0_i32_1 = arith.constant 0 : i32
    return %c0_i32, %c0_i32_0 : i32, i32
  }
  func.func @transform_3(%arg0: i32) -> (i32, i32) {
    %c0_i32 = arith.constant 0 : i32
    %c0_i32_0 = arith.constant 0 : i32
    %c0_i32_1 = arith.constant 0 : i32
    return %c0_i32, %c0_i32_0 : i32, i32
  }
  func.func @transform_4(%arg0: i32) -> (i32, i32) {
    %c0_i32 = arith.constant 0 : i32
    %c0_i32_0 = arith.constant 0 : i32
    %c0_i32_1 = arith.constant 0 : i32
    return %c0_i32, %c0_i32_0 : i32, i32
  }
  func.func @transform_5(%arg0: i32) -> (i32, i32) {
    %c0_i32 = arith.constant 0 : i32
    %c0_i32_0 = arith.constant 0 : i32
    %c0_i32_1 = arith.constant 0 : i32
    return %c0_i32, %c0_i32_0 : i32, i32
  }
  func.func @transform_6(%arg0: i32) -> i32 {
    %c0_i32 = arith.constant 0 : i32
    %c0_i32_0 = arith.constant 0 : i32
    return %c0_i32 : i32
  }
  func.func @transform_7(%arg0: i32) -> (i32, i32) {
    %c0_i32 = arith.constant 0 : i32
    %c0_i32_0 = arith.constant 0 : i32
    return %arg0, %c0_i32 : i32, i32
  }
}

</mosaic_0001>

<llo_original>
// kernel: tpu_custom_call.1
$region0: #{tpu_custom_call.1}
  #allocation0 [shape = 'u32[]', space=smem, size = 0x4, offset = 0x4, fixed_abs, tag = 'smem constant byte address 0x4 - core index']
  #allocation1 [shape = 'u32[144,128]{1,0:T(1,128)}', space=vmem, size = 0x12000, scoped, tag = 'internal scratch']
  #allocation2 [shape = 'f32[1]{0:T(128)S(6)}', space=smem, size = 0x200, scoped, tag = 'scoped memory for tpu_custom_call.1']
  %s0 = inlined_call_operand.vmem [shape: f32[16,32], index: 0, kind: input, shape index: {}]
  %s1 = inlined_call_operand.vmem [shape: bf16[32,128], index: 1, kind: input, shape index: {}]
  %s2 = inlined_call_operand.vmem [shape: f32[1,128], index: 2, kind: input, shape index: {}]
  %s3 = inlined_call_operand.vmem [shape: bf16[128,64], index: 3, kind: input, shape index: {}]
  %s4 = inlined_call_operand.vmem [shape: f32[1,64], index: 4, kind: input, shape index: {}]
  %s5 = inlined_call_operand.vmem [shape: f32[1,64], index: 5, kind: input, shape index: {}]
  %s6 = inlined_call_operand.<no memory space> [shape: f32[1], index: 6, kind: input, shape index: {}]
  %s7 = inlined_call_operand.vmem [shape: f32[16,1], index: 7, kind: output, shape index: {}]
  %s8 = sld [smem:[#allocation0]]
  $region38: #{tpu_custom_call.1} parent=0
    _
  %s10 = ssub.s32 1, %s8
  %s11 = scalar_select 0, %s10, %s8
  %12 = sst [smem:[#allocation2]] %s6
  // Predicated region
  $region2: #{tpu_custom_call.1} parent=0 // pred_check
    _
  $region3: #{tpu_custom_call.1} parent=0 // pred_check_branch
    %14 = sbr.rel (0) target = $region5
  $region4: #{tpu_custom_call.1} parent=0 // pred_region
    _
  $region5: #{tpu_custom_call.1} parent=0 // pred_fallthru
    _
  // Predicated region
  $region6: #{tpu_custom_call.1} parent=0 // pred_check
    _
  $region7: #{tpu_custom_call.1} parent=0 // pred_check_branch
    %16 = sbr.rel (0) target = $region9
  $region8: #{tpu_custom_call.1} parent=0 // pred_region
    _
  $region9: #{tpu_custom_call.1} parent=0 // pred_fallthru
    _
  // Predicated region
  $region10: #{tpu_custom_call.1} parent=0 // pred_check
    _
  $region11: #{tpu_custom_call.1} parent=0 // pred_check_branch
    %18 = sbr.rel (0) target = $region13
  $region12: #{tpu_custom_call.1} parent=0 // pred_region
    _
  $region13: #{tpu_custom_call.1} parent=0 // pred_fallthru
    _
  // Predicated region
  $region14: #{tpu_custom_call.1} parent=0 // pred_check
    _
  $region15: #{tpu_custom_call.1} parent=0 // pred_check_branch
    %20 = sbr.rel (0) target = $region17
  $region16: #{tpu_custom_call.1} parent=0 // pred_region
    _
  $region17: #{tpu_custom_call.1} parent=0 // pred_fallthru
    _
  // Predicated region
  $region18: #{tpu_custom_call.1} parent=0 // pred_check
    _
  $region19: #{tpu_custom_call.1} parent=0 // pred_check_branch
    %22 = sbr.rel (0) target = $region21
  $region20: #{tpu_custom_call.1} parent=0 // pred_region
    _
  $region21: #{tpu_custom_call.1} parent=0 // pred_fallthru
    _
  // Predicated region
  $region22: #{tpu_custom_call.1} parent=0 // pred_check
    _
  $region23: #{tpu_custom_call.1} parent=0 // pred_check_branch
    %24 = sbr.rel (0) target = $region25
  $region24: #{tpu_custom_call.1} parent=0 // pred_region
    _
  $region25: #{tpu_custom_call.1} parent=0 // pred_fallthru
    _
  // Predicated region
  $region26: #{tpu_custom_call.1} parent=0 // pred_check
    _
  $region27: #{tpu_custom_call.1} parent=0 // pred_check_branch
    %26 = sbr.rel (0) target = $region29
  $region28: #{tpu_custom_call.1} parent=0 // pred_region
    _
  $region29: #{tpu_custom_call.1} parent=0 // pred_fallthru
    _
  %v28 = vld [vmem:[%s0] sm:$0xff]
  %v29 = vld [vmem:[%s0 + $0x8] sm:$0xff]
  %v30 = vpack.c.bf16 %v29, %v28
  %v31 = vld [vmem:[%s1] sm:$0xf]
  %v32 = vld [vmem:[%s1 + $0x4] sm:$0xf]
  %v33 = vld [vmem:[%s1 + $0x8] sm:$0xf]
  %v34 = vld [vmem:[%s1 + $0xc] sm:$0xf]
  %v35 = vld [vmem:[%s2] sm:$0x1]
  %v37 = vlaneseq
  %v38 = vshrl.u32 %v37, 7
  %v39 = vsub.s32 0, %v38
  %v40 = vrot.slane %v35, %v39
  %v46 = vunpack.c.l.b16 %v31
  %v47 = vunpack.c.l.b16 %v32
  %v48 = vunpack.c.l.b16 %v33
  %v49 = vunpack.c.l.b16 %v34
  %v50 = vpack.c.b16 %v47, %v46
  %v51 = vpack.c.b16 %v49, %v48
  %vm54 = vcmask 261120
  %v56 = vsel %vm54, %v30, 0
  %58 = vmatprep.subr.bf16.mxu0 0
  %59 = vmatpush1.bf16.msra.mxu0 0
  %60 = vmatprep.subr.bf16.mxu0 0
  %61 = vmatpush1.bf16.msra.mxu0 0
  %62 = vmatprep.subr.bf16.mxu0 0
  %63 = vmatpush1.bf16.msra.mxu0 0
  %64 = vmatprep.subr.bf16.mxu0 0
  %65 = vmatpush1.bf16.msra.mxu0 0
  %66 = vmatprep.subr.bf16.mxu0 0
  %67 = vmatpush1.bf16.msra.mxu0 0
  %68 = vmatprep.subr.bf16.mxu0 0
  %69 = vmatpush1.bf16.msra.mxu0 0
  %70 = vmatprep.subr.bf16.mxu0 0
  %71 = vmatpush1.bf16.msra.mxu0 %v51
  %72 = vmatprep.subr.bf16.mxu0 0
  %73 = vmatpush1.bf16.msra.mxu0 %v50
  %74 = vmatprep.subr.bf16.mxu0 0
  %75 = vmatpush2.bf16.msra.mxu0 0
  %76 = vmatprep.subr.bf16.mxu0 0
  %77 = vmatpush2.bf16.msra.mxu0 0
  %78 = vmatprep.subr.bf16.mxu0 0
  %79 = vmatpush2.bf16.msra.mxu0 0
  %80 = vmatprep.subr.bf16.mxu0 0
  %81 = vmatpush2.bf16.msra.mxu0 0
  %82 = vmatprep.subr.bf16.mxu0 0
  %83 = vmatpush2.bf16.msra.mxu0 0
  %84 = vmatprep.subr.bf16.mxu0 0
  %85 = vmatpush2.bf16.msra.mxu0 0
  %86 = vmatprep.subr.bf16.mxu0 0
  %87 = vmatpush2.bf16.msra.mxu0 0
  %88 = vmatprep.subr.bf16.mxu0 0
  %89 = vmatpush2.bf16.msra.mxu0 0
  %90 = vmatprep.mubr.bf16.mxu0 0
  %91 = vmatmul.mubr.bf16.gmra.mxu0 %v56
  %v92 = vpop.f32.mrf.mxu0
  %v93 = vadd.f32 %v40, %v92
  %v94 = vpop.f32.mrf.mxu0
  %v95 = vpop.f32.mrf.mxu0
  %v96 = vadd.f32 %v40, %v95
  %v97 = vpop.f32.mrf.mxu0
  %98 = vdwg.mxu0
  %v99 = vmax.f32 %v93, 0.0
  %v100 = vmax.f32 %v96, 0.0
  %v101 = vpack.c.bf16 %v100, %v99
  %v102 = vld [vmem:[%s3] sm:$0xf]
  %v103 = vld [vmem:[%s3 + $0x4] sm:$0xf]
  %v104 = vld [vmem:[%s3 + $0x8] sm:$0xf]
  %v105 = vld [vmem:[%s3 + $0xc] sm:$0xf]
  %v106 = vld [vmem:[%s3 + $0x10] sm:$0xf]
  %v107 = vld [vmem:[%s3 + $0x14] sm:$0xf]
  %v108 = vld [vmem:[%s3 + $0x18] sm:$0xf]
  %v109 = vld [vmem:[%s3 + $0x1c] sm:$0xf]
  %v110 = vld [vmem:[%s3 + $0x20] sm:$0xf]
  %v111 = vld [vmem:[%s3 + $0x24] sm:$0xf]
  %v112 = vld [vmem:[%s3 + $0x28] sm:$0xf]
  %v113 = vld [vmem:[%s3 + $0x2c] sm:$0xf]
  %v114 = vld [vmem:[%s3 + $0x30] sm:$0xf]
  %v115 = vld [vmem:[%s3 + $0x34] sm:$0xf]
  %v116 = vld [vmem:[%s3 + $0x38] sm:$0xf]
  %v117 = vld [vmem:[%s3 + $0x3c] sm:$0xf]
  %v118 = vld [vmem:[%s4] sm:$0x1]
  %v120 = vlaneseq
  %v121 = vshrl.u32 %v120, 7
  %v122 = vsub.s32 0, %v121
  %v123 = vrot.slane %v118, %v122
  %v141 = vunpack.c.l.b16 %v102
  %v142 = vunpack.c.l.b16 %v103
  %v143 = vunpack.c.l.b16 %v104
  %v144 = vunpack.c.l.b16 %v105
  %v145 = vunpack.c.l.b16 %v106
  %v146 = vunpack.c.l.b16 %v107
  %v147 = vunpack.c.l.b16 %v108
  %v148 = vunpack.c.l.b16 %v109
  %v149 = vunpack.c.l.b16 %v110
  %v150 = vunpack.c.l.b16 %v111
  %v151 = vunpack.c.l.b16 %v112
  %v152 = vunpack.c.l.b16 %v113
  %v153 = vunpack.c.l.b16 %v114
  %v154 = vunpack.c.l.b16 %v115
  %v155 = vunpack.c.l.b16 %v116
  %v156 = vunpack.c.l.b16 %v117
  %v157 = vpack.c.b16 %v142, %v141
  %v158 = vpack.c.b16 %v144, %v143
  %v159 = vpack.c.b16 %v146, %v145
  %v160 = vpack.c.b16 %v148, %v147
  %v161 = vpack.c.b16 %v150, %v149
  %v162 = vpack.c.b16 %v152, %v151
  %v163 = vpack.c.b16 %v154, %v153
  %v164 = vpack.c.b16 %v156, %v155
  %173 = vmatprep.subr.bf16.mxu0 0
  %174 = vmatpush1.bf16.msra.mxu0 %v164
  %175 = vmatprep.subr.bf16.mxu0 0
  %176 = vmatpush1.bf16.msra.mxu0 %v163
  %177 = vmatprep.subr.bf16.mxu0 0
  %178 = vmatpush1.bf16.msra.mxu0 %v162
  %179 = vmatprep.subr.bf16.mxu0 0
  %180 = vmatpush1.bf16.msra.mxu0 %v161
  %181 = vmatprep.subr.bf16.mxu0 0
  %182 = vmatpush1.bf16.msra.mxu0 %v160
  %183 = vmatprep.subr.bf16.mxu0 0
  %184 = vmatpush1.bf16.msra.mxu0 %v159
  %185 = vmatprep.subr.bf16.mxu0 0
  %186 = vmatpush1.bf16.msra.mxu0 %v158
  %187 = vmatprep.subr.bf16.mxu0 0
  %188 = vmatpush1.bf16.msra.mxu0 %v157
  %189 = vmatprep.subr.bf16.mxu0 0
  %190 = vmatpush2.bf16.msra.mxu0 0
  %191 = vmatprep.subr.bf16.mxu0 0
  %192 = vmatpush2.bf16.msra.mxu0 0
  %193 = vmatprep.subr.bf16.mxu0 0
  %194 = vmatpush2.bf16.msra.mxu0 0
  %195 = vmatprep.subr.bf16.mxu0 0
  %196 = vmatpush2.bf16.msra.mxu0 0
  %197 = vmatprep.subr.bf16.mxu0 0
  %198 = vmatpush2.bf16.msra.mxu0 0
  %199 = vmatprep.subr.bf16.mxu0 0
  %200 = vmatpush2.bf16.msra.mxu0 0
  %201 = vmatprep.subr.bf16.mxu0 0
  %202 = vmatpush2.bf16.msra.mxu0 0
  %203 = vmatprep.subr.bf16.mxu0 0
  %204 = vmatpush2.bf16.msra.mxu0 0
  %205 = vmatprep.mubr.bf16.mxu0 0
  %206 = vmatmul.mubr.bf16.gmra.mxu0 %v101
  %v207 = vpop.f32.mrf.mxu0
  %v208 = vadd.f32 %v123, %v207
  %v209 = vpop.f32.mrf.mxu0
  %v210 = vpop.f32.mrf.mxu0
  %v211 = vadd.f32 %v123, %v210
  %v212 = vpop.f32.mrf.mxu0
  %213 = vdwg.mxu0
  %v214 = vmax.f32 %v208, 0.0
  %v215 = vmax.f32 %v211, 0.0
  %v216 = vld [vmem:[%s5] sm:$0x1]
  %v218 = vlaneseq
  %v219 = vshrl.u32 %v218, 7
  %v220 = vsub.s32 0, %v219
  %v221 = vrot.slane %v216, %v220
  %v223 = vmul.f32 %v214, %v221
  %v224 = vmul.f32 %v215, %v221
  %vm225 = vcmask 523264
  %v226 = vsel %vm225, %v223, 0.0
  %227 = vadd.xlane.f32.xlu0 %v226
  %v228 = vpop.xlane.xlu0 %227
  %v229 = vsel %vm225, %v224, 0.0
  %230 = vadd.xlane.f32.xlu0 %v229
  %v231 = vpop.xlane.xlu0 %230
  %s232 = sld [smem:[#allocation2]]
  %v233 = vstv %s232
  %v234 = vadd.f32 %v228, %v233
  %v235 = vadd.f32 %v231, %v233
  %v236 = vand.u32 2147483647, %v234
  %v237 = vand.u32 2147483647, %v235
  %v238 = vsub.f32 0.0, %v236
  %v239 = vsub.f32 0.0, %v237
  %v240 = vmul.f32 %v238, 1.442695
  %v241 = vpow.pop %v240
  %v242 = vmul.f32 %v239, 1.442695
  %v243 = vpow.pop %v242
  %v244 = vadd.f32 %v241, 1.0
  %v245 = vadd.f32 %v243, 1.0
  %v246 = vrcp.pop %v244
  %v247 = vrcp.pop %v245
  %v248 = vmul.f32 %v241, %v246
  %v249 = vmul.f32 %v243, %v247
  %vm250 = vcmp.ge.f32.partialorder %v234, 0.0
  %vm251 = vcmp.ge.f32.partialorder %v235, 0.0
  %v252 = vsub.f32 1.0, %v248
  %v253 = vsub.f32 1.0, %v249
  %v254 = vsel %vm250, %v252, %v248
  %v255 = vsel %vm251, %v253, %v249
  %vm256 = vcmask 7168
  %257 = vst.msk [vmem:[%s7] sm:$0xff] %vm256, %v254
  %258 = vst.msk [vmem:[%s7 + $0x8] sm:$0xff] %vm256, %v255
  // Predicated region
  $region30: #{tpu_custom_call.1} parent=0 // pred_check
    _
  $region31: #{tpu_custom_call.1} parent=0 // pred_check_branch
    %260 = sbr.rel (0) target = $region33
  $region32: #{tpu_custom_call.1} parent=0 // pred_region
    _
  $region33: #{tpu_custom_call.1} parent=0 // pred_fallthru
    _
  // Predicated region
  $region34: #{tpu_custom_call.1} parent=0 // pred_check
    _
  $region35: #{tpu_custom_call.1} parent=0 // pred_check_branch
    %262 = sbr.rel (0) target = $region37
  $region36: #{tpu_custom_call.1} parent=0 // pred_region
    _
  $region37: #{tpu_custom_call.1} parent=0 // pred_fallthru
    _

</llo_original>
